<compile_context>
chip_gen: v6e
topology: v6e:2x2x1
jax: 0.10.0
libtpu: 0.0.40
codegen_flags: <defaults>
</compile_context>

<pallas_src>
import jax
import jax.numpy as jnp
from jax.experimental import pallas as pl
from jax.experimental.pallas import tpu as pltpu


def _round_up(x, m):
    return (x + m - 1) // m * m


def critic_kernel(s_ref, a_ref, w1s_ref, w1a_ref, b1_ref, w2_ref, b2_ref,
                  w3t_ref, b3_ref, o_ref):
    # fc1: h1 = state @ W1s + action @ W1a + b1  (f32 accumulation on the MXU)
    h1 = jnp.dot(s_ref[...], w1s_ref[...], preferred_element_type=jnp.float32)
    h1 = h1 + jnp.dot(a_ref[...], w1a_ref[...],
                      preferred_element_type=jnp.float32)
    h1 = jnp.maximum(h1 + b1_ref[...], 0.0)

    # fc2 + ReLU (bf16 MXU operands, f32 accum / VPU work)
    h2 = jnp.dot(h1.astype(w2_ref.dtype), w2_ref[...],
                 preferred_element_type=jnp.float32)
    h2 = jnp.maximum(h2 + b2_ref[...], 0.0)

    # q head, computed transposed so the store is lane-dense:
    #   q_row[1, TILE_B] = W3t[1, fc2] . h2[TILE_B, fc2]^T  (contract on fc2)
    q = jax.lax.dot_general(
        w3t_ref[...], h2.astype(w3t_ref.dtype),
        dimension_numbers=(((1,), (1,)), ((), ())),
        preferred_element_type=jnp.float32)
    q = q + b3_ref[...]                       # (1, 1) bias broadcasts over lanes
    o_ref[0] = q.astype(o_ref.dtype)          # (1, TILE_B) unmasked store


def critic_forward(state, action, params, *, tile_b=512):
    """state: (B, input_dims) f32, action: (B, n_actions) f32 -> q: (B, 1) f32."""
    w1s, w1a, b1, w2, b2, w3t, b3 = params
    B = state.shape[0]

    # Lane-dense output + clean tiling need TILE_B to be a multiple of 128.
    tb = _round_up(min(tile_b, _round_up(B, 128)), 128)
    pb = _round_up(B, tb)
    n_tiles = pb // tb
    pad = pb - B

    cdt = w1s.dtype                 # bf16 compute dtype for MXU operands
    s = state.astype(cdt)
    a = action.astype(cdt)
    if pad:
        s = jnp.pad(s, ((0, pad), (0, 0)))
        a = jnp.pad(a, ((0, pad), (0, 0)))

    def resident(arr):
        # Same block every grid step -> fetched once, stays VMEM-resident.
        return pl.BlockSpec(arr.shape, lambda i: (0, 0))

    out = pl.pallas_call(
        critic_kernel,
        out_shape=jax.ShapeDtypeStruct((n_tiles, 1, tb), jnp.float32),
        grid=(n_tiles,),
        in_specs=[
            pl.BlockSpec((tb, s.shape[1]), lambda i: (i, 0)),   # state tile
            pl.BlockSpec((tb, a.shape[1]), lambda i: (i, 0)),   # action tile
            resident(w1s), resident(w1a), resident(b1),
            resident(w2), resident(b2),
            resident(w3t), resident(b3),
        ],
        out_specs=pl.BlockSpec((1, 1, tb), lambda i: (i, 0, 0)),
        compiler_params=pltpu.CompilerParams(
            dimension_semantics=("parallel",),   # megacore on v7x
            vmem_limit_bytes=32 * 1024 * 1024,   # safe budget on v5e/v6e/v7x
        ),
    )(s, a, w1s, w1a, b1, w2, b2, w3t, b3)

    # (n_tiles, 1, tb) lane-dense slab -> (B, 1)
    return out.reshape(pb)[:B].reshape(B, 1)


def init_params(key, input_dims, n_actions, fc1_dims, fc2_dims,
                weight_dtype=jnp.bfloat16):
    """Mimics torch.nn.Linear default init (U[-1/sqrt(fan_in), +1/sqrt(fan_in)]).

    Weights are stored pre-transposed (in, out); fc1's weight is pre-split into
    its state-rows / action-rows (removes the concat); the q head is stored as
    (1, fc2) so the kernel can emit a lane-dense (1, TILE_B) output. Weights are
    bf16 (MXU-native, halves HBM bytes); biases stay f32 for the VPU path.
    """
    def linear(k, fan_in, fan_out):
        kw, kb = jax.random.split(k)
        bound = 1.0 / jnp.sqrt(fan_in)
        w = jax.random.uniform(kw, (fan_in, fan_out), jnp.float32, -bound, bound)
        b = jax.random.uniform(kb, (1, fan_out), jnp.float32, -bound, bound)
        return w, b

    k1, k2, k3 = jax.random.split(key, 3)
    w1, b1 = linear(k1, input_dims + n_actions, fc1_dims)
    w2, b2 = linear(k2, fc1_dims, fc2_dims)
    w3, b3 = linear(k3, fc2_dims, 1)

    w1s = w1[:input_dims].astype(weight_dtype)
    w1a = w1[input_dims:].astype(weight_dtype)
    w3t = w3.T.astype(weight_dtype)             # (1, fc2)
    return (w1s, w1a, b1, w2.astype(weight_dtype), b2, w3t, b3)


if __name__ == "__main__":
    # Small shapes consistent with the module:
    #   input_dims=[16], n_actions=4, fc1_dims=32, fc2_dims=32, batch=8
    B, INPUT_DIMS, N_ACTIONS, FC1, FC2 = 8, 16, 4, 32, 32

    key = jax.random.PRNGKey(0)
    kp, ks, ka = jax.random.split(key, 3)

    params = init_params(kp, INPUT_DIMS, N_ACTIONS, FC1, FC2)
    state = jax.random.normal(ks, (B, INPUT_DIMS), jnp.float32)
    action = jax.random.normal(ka, (B, N_ACTIONS), jnp.float32)

    q = critic_forward(state, action, params)
    jax.block_until_ready(q)
    assert q.shape == (B, 1)

    # Pure-JAX reference with identical bf16-operand / f32-accumulation math.
    w1s, w1a, b1, w2, b2, w3t, b3 = params
    sb, ab = state.astype(w1s.dtype), action.astype(w1a.dtype)
    h1 = (jnp.dot(sb, w1s, preferred_element_type=jnp.float32)
          + jnp.dot(ab, w1a, preferred_element_type=jnp.float32) + b1)
    h1 = jnp.maximum(h1, 0.0)
    h2 = jnp.maximum(jnp.dot(h1.astype(w2.dtype), w2,
                             preferred_element_type=jnp.float32) + b2, 0.0)
    ref = jnp.dot(h2.astype(w3t.dtype), w3t.T,
                  preferred_element_type=jnp.float32) + b3
    assert jnp.allclose(q, ref, atol=1e-3, rtol=1e-3)

    # Sanity check against full-f32 math of the original module (loose tol,
    # since parameters are stored in bf16).
    xf = jnp.concatenate([state, action], axis=1)
    w1f = jnp.concatenate([w1s, w1a], axis=0).astype(jnp.float32)
    ref32 = jnp.maximum(xf @ w1f + b1, 0.0)
    ref32 = jnp.maximum(ref32 @ w2.astype(jnp.float32) + b2, 0.0)
    ref32 = ref32 @ w3t.T.astype(jnp.float32) + b3
    assert jnp.allclose(q, ref32, atol=5e-2, rtol=5e-2)

    print("KERNEL_OK")
</pallas_src>

<mosaic_0001>
module attributes {stable_mosaic.version = 11 : i64} {
  func.func @critic_kernel(%arg0: i32, %arg1: memref<128x16xbf16, #tpu.memory_space<vmem>>, %arg2: memref<128x4xbf16, #tpu.memory_space<vmem>>, %arg3: memref<16x32xbf16, #tpu.memory_space<vmem>>, %arg4: memref<4x32xbf16, #tpu.memory_space<vmem>>, %arg5: memref<1x32xf32, #tpu.memory_space<vmem>>, %arg6: memref<32x32xbf16, #tpu.memory_space<vmem>>, %arg7: memref<1x32xf32, #tpu.memory_space<vmem>>, %arg8: memref<1x32xbf16, #tpu.memory_space<vmem>>, %arg9: memref<1x1xf32, #tpu.memory_space<vmem>>, %arg10: memref<1x1x128xf32, #tpu.memory_space<vmem>>) attributes {dimension_semantics = [#tpu.dimension_semantics<parallel>], iteration_bounds = array<i64: 1>, scalar_prefetch = 0 : i64, scratch_operands = 0 : i64, tpu.core_type = #tpu.core_type<tc>, window_params = [{transform_indices = @transform_0, window_bounds = array<i64: 128, 16>}, {transform_indices = @transform_1, window_bounds = array<i64: 128, 4>}, {pipeline_mode = #tpu.pipeline_mode<synchronous>, transform_indices = @transform_2, window_bounds = array<i64: 16, 32>}, {pipeline_mode = #tpu.pipeline_mode<synchronous>, transform_indices = @transform_3, window_bounds = array<i64: 4, 32>}, {pipeline_mode = #tpu.pipeline_mode<synchronous>, transform_indices = @transform_4, window_bounds = array<i64: 1, 32>}, {pipeline_mode = #tpu.pipeline_mode<synchronous>, transform_indices = @transform_5, window_bounds = array<i64: 32, 32>}, {pipeline_mode = #tpu.pipeline_mode<synchronous>, transform_indices = @transform_6, window_bounds = array<i64: 1, 32>}, {pipeline_mode = #tpu.pipeline_mode<synchronous>, transform_indices = @transform_7, window_bounds = array<i64: 1, 32>}, {pipeline_mode = #tpu.pipeline_mode<synchronous>, transform_indices = @transform_8, window_bounds = array<i64: 1, 1>}, {transform_indices = @transform_9, window_bounds = array<i64: 1, 1, 128>}]} {
    %c0 = arith.constant 0 : index
    %c0_0 = arith.constant 0 : index
    %0 = vector.load %arg1[%c0, %c0_0] : memref<128x16xbf16, #tpu.memory_space<vmem>>, vector<128x16xbf16>
    %c0_1 = arith.constant 0 : index
    %c0_2 = arith.constant 0 : index
    %1 = vector.load %arg3[%c0_1, %c0_2] : memref<16x32xbf16, #tpu.memory_space<vmem>>, vector<16x32xbf16>
    %cst = arith.constant dense<0.000000e+00> : vector<128x32xf32>
    %2 = tpu.matmul %0, %1, %cst {dimension_numbers = #tpu.dot_dimension_numbers<[1], [0], [0], [1], [0, 0, 1, 1], [], []>} : vector<128x16xbf16>, vector<16x32xbf16>, vector<128x32xf32> -> vector<128x32xf32>
    %c0_3 = arith.constant 0 : index
    %c0_4 = arith.constant 0 : index
    %3 = vector.load %arg2[%c0_3, %c0_4] : memref<128x4xbf16, #tpu.memory_space<vmem>>, vector<128x4xbf16>
    %c0_5 = arith.constant 0 : index
    %c0_6 = arith.constant 0 : index
    %4 = vector.load %arg4[%c0_5, %c0_6] : memref<4x32xbf16, #tpu.memory_space<vmem>>, vector<4x32xbf16>
    %cst_7 = arith.constant dense<0.000000e+00> : vector<128x32xf32>
    %5 = tpu.matmul %3, %4, %cst_7 {dimension_numbers = #tpu.dot_dimension_numbers<[1], [0], [0], [1], [0, 0, 1, 1], [], []>} : vector<128x4xbf16>, vector<4x32xbf16>, vector<128x32xf32> -> vector<128x32xf32>
    %6 = arith.addf %2, %5 : vector<128x32xf32>
    %c0_8 = arith.constant 0 : index
    %c0_9 = arith.constant 0 : index
    %7 = vector.load %arg5[%c0_8, %c0_9] : memref<1x32xf32, #tpu.memory_space<vmem>>, vector<1x32xf32>
    %8 = vector.broadcast %7 : vector<1x32xf32> to vector<128x32xf32>
    %9 = arith.addf %6, %8 : vector<128x32xf32>
    %cst_10 = arith.constant 0.000000e+00 : f32
    %10 = vector.broadcast %cst_10 : f32 to vector<128x32xf32>
    %11 = arith.maximumf %9, %10 : vector<128x32xf32>
    %12 = arith.truncf %11 : vector<128x32xf32> to vector<128x32xbf16>
    %c0_11 = arith.constant 0 : index
    %c0_12 = arith.constant 0 : index
    %13 = vector.load %arg6[%c0_11, %c0_12] : memref<32x32xbf16, #tpu.memory_space<vmem>>, vector<32x32xbf16>
    %cst_13 = arith.constant dense<0.000000e+00> : vector<128x32xf32>
    %14 = tpu.matmul %12, %13, %cst_13 {dimension_numbers = #tpu.dot_dimension_numbers<[1], [0], [0], [1], [0, 0, 1, 1], [], []>} : vector<128x32xbf16>, vector<32x32xbf16>, vector<128x32xf32> -> vector<128x32xf32>
    %c0_14 = arith.constant 0 : index
    %c0_15 = arith.constant 0 : index
    %15 = vector.load %arg7[%c0_14, %c0_15] : memref<1x32xf32, #tpu.memory_space<vmem>>, vector<1x32xf32>
    %16 = vector.broadcast %15 : vector<1x32xf32> to vector<128x32xf32>
    %17 = arith.addf %14, %16 : vector<128x32xf32>
    %cst_16 = arith.constant 0.000000e+00 : f32
    %18 = vector.broadcast %cst_16 : f32 to vector<128x32xf32>
    %19 = arith.maximumf %17, %18 : vector<128x32xf32>
    %c0_17 = arith.constant 0 : index
    %c0_18 = arith.constant 0 : index
    %20 = vector.load %arg8[%c0_17, %c0_18] : memref<1x32xbf16, #tpu.memory_space<vmem>>, vector<1x32xbf16>
    %21 = arith.truncf %19 : vector<128x32xf32> to vector<128x32xbf16>
    %cst_19 = arith.constant dense<0.000000e+00> : vector<1x128xf32>
    %22 = tpu.matmul %20, %21, %cst_19 {dimension_numbers = #tpu.dot_dimension_numbers<[1], [1], [0], [0], [0, 0, 1, 0], [], []>} : vector<1x32xbf16>, vector<128x32xbf16>, vector<1x128xf32> -> vector<1x128xf32>
    %c0_20 = arith.constant 0 : index
    %c0_21 = arith.constant 0 : index
    %23 = vector.load %arg9[%c0_20, %c0_21] : memref<1x1xf32, #tpu.memory_space<vmem>>, vector<1x1xf32>
    %24 = vector.broadcast %23 : vector<1x1xf32> to vector<1x128xf32>
    %25 = arith.addf %22, %24 : vector<1x128xf32>
    %c0_22 = arith.constant 0 : index
    %c0_23 = arith.constant 0 : index
    %c0_24 = arith.constant 0 : index
    %26 = vector.load %arg10[%c0_22, %c0_23, %c0_24] : memref<1x1x128xf32, #tpu.memory_space<vmem>>, vector<1x1x128xf32>
    %27 = vector.shape_cast %26 : vector<1x1x128xf32> to vector<1x128xf32>
    %28 = vector.shape_cast %25 : vector<1x128xf32> to vector<1x1x128xf32>
    tpu.vector_store %arg10[%c0_22, %c0_23, %c0_24], %28 {strides = array<i32>} : memref<1x1x128xf32, #tpu.memory_space<vmem>>, vector<1x1x128xf32>,
    return
  }
  func.func @transform_0(%arg0: i32) -> (i32, i32) {
    %c0_i32 = arith.constant 0 : i32
    %c0_i32_0 = arith.constant 0 : i32
    return %arg0, %c0_i32 : i32, i32
  }
  func.func @transform_1(%arg0: i32) -> (i32, i32) {
    %c0_i32 = arith.constant 0 : i32
    %c0_i32_0 = arith.constant 0 : i32
    return %arg0, %c0_i32 : i32, i32
  }
  func.func @transform_2(%arg0: i32) -> (i32, i32) {
    %c0_i32 = arith.constant 0 : i32
    %c0_i32_0 = arith.constant 0 : i32
    %c0_i32_1 = arith.constant 0 : i32
    return %c0_i32, %c0_i32_0 : i32, i32
  }
  func.func @transform_3(%arg0: i32) -> (i32, i32) {
    %c0_i32 = arith.constant 0 : i32
    %c0_i32_0 = arith.constant 0 : i32
    %c0_i32_1 = arith.constant 0 : i32
    return %c0_i32, %c0_i32_0 : i32, i32
  }
  func.func @transform_4(%arg0: i32) -> (i32, i32) {
    %c0_i32 = arith.constant 0 : i32
    %c0_i32_0 = arith.constant 0 : i32
    %c0_i32_1 = arith.constant 0 : i32
    return %c0_i32, %c0_i32_0 : i32, i32
  }
  func.func @transform_5(%arg0: i32) -> (i32, i32) {
    %c0_i32 = arith.constant 0 : i32
    %c0_i32_0 = arith.constant 0 : i32
    %c0_i32_1 = arith.constant 0 : i32
    return %c0_i32, %c0_i32_0 : i32, i32
  }
  func.func @transform_6(%arg0: i32) -> (i32, i32) {
    %c0_i32 = arith.constant 0 : i32
    %c0_i32_0 = arith.constant 0 : i32
    %c0_i32_1 = arith.constant 0 : i32
    return %c0_i32, %c0_i32_0 : i32, i32
  }
  func.func @transform_7(%arg0: i32) -> (i32, i32) {
    %c0_i32 = arith.constant 0 : i32
    %c0_i32_0 = arith.constant 0 : i32
    %c0_i32_1 = arith.constant 0 : i32
    return %c0_i32, %c0_i32_0 : i32, i32
  }
  func.func @transform_8(%arg0: i32) -> (i32, i32) {
    %c0_i32 = arith.constant 0 : i32
    %c0_i32_0 = arith.constant 0 : i32
    %c0_i32_1 = arith.constant 0 : i32
    return %c0_i32, %c0_i32_0 : i32, i32
  }
  func.func @transform_9(%arg0: i32) -> (i32, i32, i32) {
    %c0_i32 = arith.constant 0 : i32
    %c0_i32_0 = arith.constant 0 : i32
    %c0_i32_1 = arith.constant 0 : i32
    return %arg0, %c0_i32, %c0_i32_0 : i32, i32, i32
  }
}

</mosaic_0001>

<llo_original>
// kernel: tpu_custom_call.1
$region0: #{tpu_custom_call.1}
  #allocation0 [shape = 'u32[]', space=smem, size = 0x4, offset = 0x4, fixed_abs, tag = 'smem constant byte address 0x4 - core index']
  #allocation1 [shape = 'u32[144,128]{1,0:T(1,128)}', space=vmem, size = 0x12000, scoped, tag = 'internal scratch']
  #allocation2 [shape = 'f32[1,1]{1,0:T(1,128)S(1)}', space=vmem, size = 0x200, scoped, tag = 'scoped memory for tpu_custom_call.1']
  %s0 = inlined_call_operand.vmem [shape: bf16[128,16], index: 0, kind: input, shape index: {}]
  %s1 = inlined_call_operand.vmem [shape: bf16[128,4], index: 1, kind: input, shape index: {}]
  %s2 = inlined_call_operand.vmem [shape: bf16[16,32], index: 2, kind: input, shape index: {}]
  %s3 = inlined_call_operand.vmem [shape: bf16[4,32], index: 3, kind: input, shape index: {}]
  %s4 = inlined_call_operand.vmem [shape: f32[1,32], index: 4, kind: input, shape index: {}]
  %s5 = inlined_call_operand.vmem [shape: bf16[32,32], index: 5, kind: input, shape index: {}]
  %s6 = inlined_call_operand.vmem [shape: f32[1,32], index: 6, kind: input, shape index: {}]
  %s7 = inlined_call_operand.vmem [shape: bf16[1,32], index: 7, kind: input, shape index: {}]
  %s8 = inlined_call_operand.<no memory space> [shape: f32[1,1], index: 8, kind: input, shape index: {}]
  %s9 = inlined_call_operand.hbm [shape: f32[1,1,128], index: 9, kind: output, shape index: {}]
  %s10 = sld [smem:[#allocation0]]
  $region46: #{tpu_custom_call.1} parent=0
    _
  %s12 = ssub.s32 1, %s10
  %s13 = scalar_select 0, %s12, %s10
  %v14 = vstv %s8
  %15 = vst [vmem:[#allocation2] sm:$0x1] %v14
  $region1: #{tpu_custom_call.1} parent=0
    #allocation3 [shape = 'u8[512]{0}', space=vmem, size = 0x400, scoped, tag = 'output window, operand 0, single buffered']
    #allocation4 [shape = 's32[1]{0}', space=sflag, size = 0x4, scoped, tag = 'scoped memory for tpu_custom_call.1']
    %16 = vsyncpa [#allocation4], 0
    // Predicated region
    $region2: #{tpu_custom_call.1} parent=1 // pred_check
      _
    $region3: #{tpu_custom_call.1} parent=1 // pred_check_branch
      %18 = sbr.rel (0) target = $region5
    $region4: #{tpu_custom_call.1} parent=1 // pred_region
      _
    $region5: #{tpu_custom_call.1} parent=1 // pred_fallthru
      _
    // Predicated region
    $region6: #{tpu_custom_call.1} parent=1 // pred_check
      _
    $region7: #{tpu_custom_call.1} parent=1 // pred_check_branch
      %20 = sbr.rel (0) target = $region9
    $region8: #{tpu_custom_call.1} parent=1 // pred_region
      _
    $region9: #{tpu_custom_call.1} parent=1 // pred_fallthru
      _
    // Predicated region
    $region10: #{tpu_custom_call.1} parent=1 // pred_check
      _
    $region11: #{tpu_custom_call.1} parent=1 // pred_check_branch
      %22 = sbr.rel (0) target = $region13
    $region12: #{tpu_custom_call.1} parent=1 // pred_region
      _
    $region13: #{tpu_custom_call.1} parent=1 // pred_fallthru
      _
    // Predicated region
    $region14: #{tpu_custom_call.1} parent=1 // pred_check
      _
    $region15: #{tpu_custom_call.1} parent=1 // pred_check_branch
      %24 = sbr.rel (0) target = $region17
    $region16: #{tpu_custom_call.1} parent=1 // pred_region
      _
    $region17: #{tpu_custom_call.1} parent=1 // pred_fallthru
      _
    // Predicated region
    $region18: #{tpu_custom_call.1} parent=1 // pred_check
      _
    $region19: #{tpu_custom_call.1} parent=1 // pred_check_branch
      %26 = sbr.rel (0) target = $region21
    $region20: #{tpu_custom_call.1} parent=1 // pred_region
      _
    $region21: #{tpu_custom_call.1} parent=1 // pred_fallthru
      _
    // Predicated region
    $region22: #{tpu_custom_call.1} parent=1 // pred_check
      _
    $region23: #{tpu_custom_call.1} parent=1 // pred_check_branch
      %28 = sbr.rel (0) target = $region25
    $region24: #{tpu_custom_call.1} parent=1 // pred_region
      _
    $region25: #{tpu_custom_call.1} parent=1 // pred_fallthru
      _
    // Predicated region
    $region26: #{tpu_custom_call.1} parent=1 // pred_check
      _
    $region27: #{tpu_custom_call.1} parent=1 // pred_check_branch
      %30 = sbr.rel (0) target = $region29
    $region28: #{tpu_custom_call.1} parent=1 // pred_region
      _
    $region29: #{tpu_custom_call.1} parent=1 // pred_fallthru
      _
    // Predicated region
    $region30: #{tpu_custom_call.1} parent=1 // pred_check
      _
    $region31: #{tpu_custom_call.1} parent=1 // pred_check_branch
      %32 = sbr.rel (0) target = $region33
    $region32: #{tpu_custom_call.1} parent=1 // pred_region
      _
    $region33: #{tpu_custom_call.1} parent=1 // pred_fallthru
      _
    // Predicated region
    $region34: #{tpu_custom_call.1} parent=1 // pred_check
      _
    $region35: #{tpu_custom_call.1} parent=1 // pred_check_branch
      %34 = sbr.rel (0) target = $region37
    $region36: #{tpu_custom_call.1} parent=1 // pred_region
      _
    $region37: #{tpu_custom_call.1} parent=1 // pred_fallthru
      _
    %v36 = vld [vmem:[%s0] sm:$0xf]
    %v37 = vld [vmem:[%s0 + $0x4] sm:$0xf]
    %v38 = vld [vmem:[%s0 + $0x8] sm:$0xf]
    %v39 = vld [vmem:[%s0 + $0xc] sm:$0xf]
    %v40 = vld [vmem:[%s0 + $0x10] sm:$0xf]
    %v41 = vld [vmem:[%s0 + $0x14] sm:$0xf]
    %v42 = vld [vmem:[%s0 + $0x18] sm:$0xf]
    %v43 = vld [vmem:[%s0 + $0x1c] sm:$0xf]
    %v44 = vld [vmem:[%s0 + $0x20] sm:$0xf]
    %v45 = vld [vmem:[%s0 + $0x24] sm:$0xf]
    %v46 = vld [vmem:[%s0 + $0x28] sm:$0xf]
    %v47 = vld [vmem:[%s0 + $0x2c] sm:$0xf]
    %v48 = vld [vmem:[%s0 + $0x30] sm:$0xf]
    %v49 = vld [vmem:[%s0 + $0x34] sm:$0xf]
    %v50 = vld [vmem:[%s0 + $0x38] sm:$0xf]
    %v51 = vld [vmem:[%s0 + $0x3c] sm:$0xf]
    %v52 = vld [vmem:[%s2] sm:$0xf]
    %v53 = vld [vmem:[%s2 + $0x4] sm:$0xf]
    %v54 = vld [vmem:[%s1] sm:$0xf]
    %v55 = vld [vmem:[%s1 + $0x4] sm:$0xf]
    %v56 = vld [vmem:[%s1 + $0x8] sm:$0xf]
    %v57 = vld [vmem:[%s1 + $0xc] sm:$0xf]
    %v58 = vld [vmem:[%s1 + $0x10] sm:$0xf]
    %v59 = vld [vmem:[%s1 + $0x14] sm:$0xf]
    %v60 = vld [vmem:[%s1 + $0x18] sm:$0xf]
    %v61 = vld [vmem:[%s1 + $0x1c] sm:$0xf]
    %v62 = vld [vmem:[%s1 + $0x20] sm:$0xf]
    %v63 = vld [vmem:[%s1 + $0x24] sm:$0xf]
    %v64 = vld [vmem:[%s1 + $0x28] sm:$0xf]
    %v65 = vld [vmem:[%s1 + $0x2c] sm:$0xf]
    %v66 = vld [vmem:[%s1 + $0x30] sm:$0xf]
    %v67 = vld [vmem:[%s1 + $0x34] sm:$0xf]
    %v68 = vld [vmem:[%s1 + $0x38] sm:$0xf]
    %v69 = vld [vmem:[%s1 + $0x3c] sm:$0xf]
    %v70 = vld [vmem:[%s3] sm:$0x3]
    %v87 = vunpack.c.l.b16 %v54
    %v88 = vunpack.c.l.b16 %v55
    %v89 = vunpack.c.l.b16 %v56
    %v90 = vunpack.c.l.b16 %v57
    %v91 = vunpack.c.l.b16 %v58
    %v92 = vunpack.c.l.b16 %v59
    %v93 = vunpack.c.l.b16 %v60
    %v94 = vunpack.c.l.b16 %v61
    %v95 = vunpack.c.l.b16 %v62
    %v96 = vunpack.c.l.b16 %v63
    %v97 = vunpack.c.l.b16 %v64
    %v98 = vunpack.c.l.b16 %v65
    %v99 = vunpack.c.l.b16 %v66
    %v100 = vunpack.c.l.b16 %v67
    %v101 = vunpack.c.l.b16 %v68
    %v102 = vunpack.c.l.b16 %v69
    %v103 = vpack.c.b16 %v88, %v87
    %v104 = vpack.c.b16 %v90, %v89
    %v105 = vpack.c.b16 %v92, %v91
    %v106 = vpack.c.b16 %v94, %v93
    %v107 = vpack.c.b16 %v96, %v95
    %v108 = vpack.c.b16 %v98, %v97
    %v109 = vpack.c.b16 %v100, %v99
    %v110 = vpack.c.b16 %v102, %v101
    %vm111 = vcmask 31744
    %v113 = vsel %vm111, %v103, 0
    %v116 = vsel %vm111, %v104, 0
    %v119 = vsel %vm111, %v105, 0
    %v122 = vsel %vm111, %v106, 0
    %v125 = vsel %vm111, %v107, 0
    %v128 = vsel %vm111, %v108, 0
    %v131 = vsel %vm111, %v109, 0
    %v134 = vsel %vm111, %v110, 0
    %vm136 = vcmask 1041408
    %v138 = vsel %vm136, %v70, 0
    %140 = vmatprep.subr.bf16.mxu0 0
    %141 = vmatpush1.bf16.msra.mxu0 0
    %142 = vmatprep.subr.bf16.mxu0 0
    %143 = vmatpush1.bf16.msra.mxu0 0
    %144 = vmatprep.subr.bf16.mxu0 0
    %145 = vmatpush1.bf16.msra.mxu0 0
    %146 = vmatprep.subr.bf16.mxu0 0
    %147 = vmatpush1.bf16.msra.mxu0 0
    %148 = vmatprep.subr.bf16.mxu0 0
    %149 = vmatpush1.bf16.msra.mxu0 0
    %150 = vmatprep.subr.bf16.mxu0 0
    %151 = vmatpush1.bf16.msra.mxu0 0
    %152 = vmatprep.subr.bf16.mxu0 0
    %153 = vmatpush1.bf16.msra.mxu0 0
    %154 = vmatprep.subr.bf16.mxu0 0
    %155 = vmatpush1.bf16.msra.mxu0 %v138
    %156 = vmatprep.subr.bf16.mxu0 0
    %157 = vmatpush2.bf16.msra.mxu0 0
    %158 = vmatprep.subr.bf16.mxu0 0
    %159 = vmatpush2.bf16.msra.mxu0 0
    %160 = vmatprep.subr.bf16.mxu0 0
    %161 = vmatpush2.bf16.msra.mxu0 0
    %162 = vmatprep.subr.bf16.mxu0 0
    %163 = vmatpush2.bf16.msra.mxu0 0
    %164 = vmatprep.subr.bf16.mxu0 0
    %165 = vmatpush2.bf16.msra.mxu0 0
    %166 = vmatprep.subr.bf16.mxu0 0
    %167 = vmatpush2.bf16.msra.mxu0 0
    %168 = vmatprep.subr.bf16.mxu0 0
    %169 = vmatpush2.bf16.msra.mxu0 0
    %170 = vmatprep.subr.bf16.mxu0 0
    %171 = vmatpush2.bf16.msra.mxu0 0
    %172 = vmatprep.mubr.bf16.mxu0 0
    %173 = vmatmul.mubr.bf16.gmra.mxu0 %v113
    %v174 = vpop.f32.mrf.mxu0
    %v175 = vadd.f32 0.0, %v174
    %v176 = vpop.f32.mrf.mxu0
    %v177 = vpop.f32.mrf.mxu0
    %v178 = vadd.f32 0.0, %v177
    %v179 = vpop.f32.mrf.mxu0
    %180 = vmatprep.mubr.bf16.mxu0 0
    %181 = vmatmul.mubr.bf16.gmra.mxu0 %v116
    %v182 = vpop.f32.mrf.mxu0
    %v183 = vadd.f32 0.0, %v182
    %v184 = vpop.f32.mrf.mxu0
    %v185 = vpop.f32.mrf.mxu0
    %v186 = vadd.f32 0.0, %v185
    %v187 = vpop.f32.mrf.mxu0
    %188 = vmatprep.mubr.bf16.mxu0 0
    %189 = vmatmul.mubr.bf16.gmra.mxu0 %v119
    %v190 = vpop.f32.mrf.mxu0
    %v191 = vadd.f32 0.0, %v190
    %v192 = vpop.f32.mrf.mxu0
    %v193 = vpop.f32.mrf.mxu0
    %v194 = vadd.f32 0.0, %v193
    %v195 = vpop.f32.mrf.mxu0
    %196 = vmatprep.mubr.bf16.mxu0 0
    %197 = vmatmul.mubr.bf16.gmra.mxu0 %v122
    %v198 = vpop.f32.mrf.mxu0
    %v199 = vadd.f32 0.0, %v198
    %v200 = vpop.f32.mrf.mxu0
    %v201 = vpop.f32.mrf.mxu0
    %v202 = vadd.f32 0.0, %v201
    %v203 = vpop.f32.mrf.mxu0
    %204 = vmatprep.mubr.bf16.mxu0 0
    %205 = vmatmul.mubr.bf16.gmra.mxu0 %v125
    %v206 = vpop.f32.mrf.mxu0
    %v207 = vadd.f32 0.0, %v206
    %v208 = vpop.f32.mrf.mxu0
    %v209 = vpop.f32.mrf.mxu0
    %v210 = vadd.f32 0.0, %v209
    %v211 = vpop.f32.mrf.mxu0
    %212 = vmatprep.mubr.bf16.mxu0 0
    %213 = vmatmul.mubr.bf16.gmra.mxu0 %v128
    %v214 = vpop.f32.mrf.mxu0
    %v215 = vadd.f32 0.0, %v214
    %v216 = vpop.f32.mrf.mxu0
    %v217 = vpop.f32.mrf.mxu0
    %v218 = vadd.f32 0.0, %v217
    %v219 = vpop.f32.mrf.mxu0
    %220 = vmatprep.mubr.bf16.mxu0 0
    %221 = vmatmul.mubr.bf16.gmra.mxu0 %v131
    %v222 = vpop.f32.mrf.mxu0
    %v223 = vadd.f32 0.0, %v222
    %v224 = vpop.f32.mrf.mxu0
    %v225 = vpop.f32.mrf.mxu0
    %v226 = vadd.f32 0.0, %v225
    %v227 = vpop.f32.mrf.mxu0
    %228 = vmatprep.mubr.bf16.mxu0 0
    %229 = vmatmul.mubr.bf16.gmra.mxu0 %v134
    %v230 = vpop.f32.mrf.mxu0
    %v231 = vadd.f32 0.0, %v230
    %v232 = vpop.f32.mrf.mxu0
    %v233 = vpop.f32.mrf.mxu0
    %v234 = vadd.f32 0.0, %v233
    %v235 = vpop.f32.mrf.mxu0
    %236 = vdwg.mxu0
    %v253 = vunpack.c.l.b16 %v36
    %v254 = vunpack.c.l.b16 %v37
    %v255 = vunpack.c.l.b16 %v38
    %v256 = vunpack.c.l.b16 %v39
    %v257 = vunpack.c.l.b16 %v40
    %v258 = vunpack.c.l.b16 %v41
    %v259 = vunpack.c.l.b16 %v42
    %v260 = vunpack.c.l.b16 %v43
    %v261 = vunpack.c.l.b16 %v44
    %v262 = vunpack.c.l.b16 %v45
    %v263 = vunpack.c.l.b16 %v46
    %v264 = vunpack.c.l.b16 %v47
    %v265 = vunpack.c.l.b16 %v48
    %v266 = vunpack.c.l.b16 %v49
    %v267 = vunpack.c.l.b16 %v50
    %v268 = vunpack.c.l.b16 %v51
    %v269 = vpack.c.b16 %v254, %v253
    %v270 = vpack.c.b16 %v256, %v255
    %v271 = vpack.c.b16 %v258, %v257
    %v272 = vpack.c.b16 %v260, %v259
    %v273 = vpack.c.b16 %v262, %v261
    %v274 = vpack.c.b16 %v264, %v263
    %v275 = vpack.c.b16 %v266, %v265
    %v276 = vpack.c.b16 %v268, %v267
    %v279 = vunpack.c.l.b16 %v52
    %v280 = vunpack.c.l.b16 %v53
    %v281 = vpack.c.b16 %v280, %v279
    %vm283 = vcmask 130048
    %v285 = vsel %vm283, %v269, 0
    %v288 = vsel %vm283, %v270, 0
    %v291 = vsel %vm283, %v271, 0
    %v294 = vsel %vm283, %v272, 0
    %v297 = vsel %vm283, %v273, 0
    %v300 = vsel %vm283, %v274, 0
    %v303 = vsel %vm283, %v275, 0
    %v306 = vsel %vm283, %v276, 0
    %308 = vmatprep.subr.bf16.mxu0 0
    %309 = vmatpush1.bf16.msra.mxu0 0
    %310 = vmatprep.subr.bf16.mxu0 0
    %311 = vmatpush1.bf16.msra.mxu0 0
    %312 = vmatprep.subr.bf16.mxu0 0
    %313 = vmatpush1.bf16.msra.mxu0 0
    %314 = vmatprep.subr.bf16.mxu0 0
    %315 = vmatpush1.bf16.msra.mxu0 0
    %316 = vmatprep.subr.bf16.mxu0 0
    %317 = vmatpush1.bf16.msra.mxu0 0
    %318 = vmatprep.subr.bf16.mxu0 0
    %319 = vmatpush1.bf16.msra.mxu0 0
    %320 = vmatprep.subr.bf16.mxu0 0
    %321 = vmatpush1.bf16.msra.mxu0 0
    %322 = vmatprep.subr.bf16.mxu0 0
    %323 = vmatpush1.bf16.msra.mxu0 %v281
    %324 = vmatprep.subr.bf16.mxu0 0
    %325 = vmatpush2.bf16.msra.mxu0 0
    %326 = vmatprep.subr.bf16.mxu0 0
    %327 = vmatpush2.bf16.msra.mxu0 0
    %328 = vmatprep.subr.bf16.mxu0 0
    %329 = vmatpush2.bf16.msra.mxu0 0
    %330 = vmatprep.subr.bf16.mxu0 0
    %331 = vmatpush2.bf16.msra.mxu0 0
    %332 = vmatprep.subr.bf16.mxu0 0
    %333 = vmatpush2.bf16.msra.mxu0 0
    %334 = vmatprep.subr.bf16.mxu0 0
    %335 = vmatpush2.bf16.msra.mxu0 0
    %336 = vmatprep.subr.bf16.mxu0 0
    %337 = vmatpush2.bf16.msra.mxu0 0
    %338 = vmatprep.subr.bf16.mxu0 0
    %339 = vmatpush2.bf16.msra.mxu0 0
    %340 = vmatprep.mubr.bf16.mxu0 0
    %341 = vmatmul.mubr.bf16.gmra.mxu0 %v285
    %v342 = vpop.f32.mrf.mxu0
    %v343 = vadd.f32 %v175, %v342
    %v344 = vpop.f32.mrf.mxu0
    %v345 = vpop.f32.mrf.mxu0
    %v346 = vadd.f32 %v178, %v345
    %v347 = vpop.f32.mrf.mxu0
    %348 = vmatprep.mubr.bf16.mxu0 0
    %349 = vmatmul.mubr.bf16.gmra.mxu0 %v288
    %v350 = vpop.f32.mrf.mxu0
    %v351 = vadd.f32 %v183, %v350
    %v352 = vpop.f32.mrf.mxu0
    %v353 = vpop.f32.mrf.mxu0
    %v354 = vadd.f32 %v186, %v353
    %v355 = vpop.f32.mrf.mxu0
    %356 = vmatprep.mubr.bf16.mxu0 0
    %357 = vmatmul.mubr.bf16.gmra.mxu0 %v291
    %v358 = vpop.f32.mrf.mxu0
    %v359 = vadd.f32 %v191, %v358
    %v360 = vpop.f32.mrf.mxu0
    %v361 = vpop.f32.mrf.mxu0
    %v362 = vadd.f32 %v194, %v361
    %v363 = vpop.f32.mrf.mxu0
    %364 = vmatprep.mubr.bf16.mxu0 0
    %365 = vmatmul.mubr.bf16.gmra.mxu0 %v294
    %v366 = vpop.f32.mrf.mxu0
    %v367 = vadd.f32 %v199, %v366
    %v368 = vpop.f32.mrf.mxu0
    %v369 = vpop.f32.mrf.mxu0
    %v370 = vadd.f32 %v202, %v369
    %v371 = vpop.f32.mrf.mxu0
    %372 = vmatprep.mubr.bf16.mxu0 0
    %373 = vmatmul.mubr.bf16.gmra.mxu0 %v297
    %v374 = vpop.f32.mrf.mxu0
    %v375 = vadd.f32 %v207, %v374
    %v376 = vpop.f32.mrf.mxu0
    %v377 = vpop.f32.mrf.mxu0
    %v378 = vadd.f32 %v210, %v377
    %v379 = vpop.f32.mrf.mxu0
    %380 = vmatprep.mubr.bf16.mxu0 0
    %381 = vmatmul.mubr.bf16.gmra.mxu0 %v300
    %v382 = vpop.f32.mrf.mxu0
    %v383 = vadd.f32 %v215, %v382
    %v384 = vpop.f32.mrf.mxu0
    %v385 = vpop.f32.mrf.mxu0
    %v386 = vadd.f32 %v218, %v385
    %v387 = vpop.f32.mrf.mxu0
    %388 = vmatprep.mubr.bf16.mxu0 0
    %389 = vmatmul.mubr.bf16.gmra.mxu0 %v303
    %v390 = vpop.f32.mrf.mxu0
    %v391 = vadd.f32 %v223, %v390
    %v392 = vpop.f32.mrf.mxu0
    %v393 = vpop.f32.mrf.mxu0
    %v394 = vadd.f32 %v226, %v393
    %v395 = vpop.f32.mrf.mxu0
    %396 = vmatprep.mubr.bf16.mxu0 0
    %397 = vmatmul.mubr.bf16.gmra.mxu0 %v306
    %v398 = vpop.f32.mrf.mxu0
    %v399 = vadd.f32 %v231, %v398
    %v400 = vpop.f32.mrf.mxu0
    %v401 = vpop.f32.mrf.mxu0
    %v402 = vadd.f32 %v234, %v401
    %v403 = vpop.f32.mrf.mxu0
    %404 = vdwg.mxu0
    %v405 = vld [vmem:[%s4] sm:$0x1]
    %v407 = vlaneseq
    %v408 = vshrl.u32 %v407, 7
    %v409 = vsub.s32 0, %v408
    %v410 = vrot.slane %v405, %v409
    %v412 = vadd.f32 %v343, %v410
    %v413 = vadd.f32 %v346, %v410
    %v414 = vadd.f32 %v351, %v410
    %v415 = vadd.f32 %v354, %v410
    %v416 = vadd.f32 %v359, %v410
    %v417 = vadd.f32 %v362, %v410
    %v418 = vadd.f32 %v367, %v410
    %v419 = vadd.f32 %v370, %v410
    %v420 = vadd.f32 %v375, %v410
    %v421 = vadd.f32 %v378, %v410
    %v422 = vadd.f32 %v383, %v410
    %v423 = vadd.f32 %v386, %v410
    %v424 = vadd.f32 %v391, %v410
    %v425 = vadd.f32 %v394, %v410
    %v426 = vadd.f32 %v399, %v410
    %v427 = vadd.f32 %v402, %v410
    %v428 = vmax.f32 %v412, 0.0
    %v429 = vmax.f32 %v413, 0.0
    %v430 = vmax.f32 %v414, 0.0
    %v431 = vmax.f32 %v415, 0.0
    %v432 = vmax.f32 %v416, 0.0
    %v433 = vmax.f32 %v417, 0.0
    %v434 = vmax.f32 %v418, 0.0
    %v435 = vmax.f32 %v419, 0.0
    %v436 = vmax.f32 %v420, 0.0
    %v437 = vmax.f32 %v421, 0.0
    %v438 = vmax.f32 %v422, 0.0
    %v439 = vmax.f32 %v423, 0.0
    %v440 = vmax.f32 %v424, 0.0
    %v441 = vmax.f32 %v425, 0.0
    %v442 = vmax.f32 %v426, 0.0
    %v443 = vmax.f32 %v427, 0.0
    %v444 = vpack.c.bf16 %v429, %v428
    %v445 = vpack.c.bf16 %v431, %v430
    %v446 = vpack.c.bf16 %v433, %v432
    %v447 = vpack.c.bf16 %v435, %v434
    %v448 = vpack.c.bf16 %v437, %v436
    %v449 = vpack.c.bf16 %v439, %v438
    %v450 = vpack.c.bf16 %v441, %v440
    %v451 = vpack.c.bf16 %v443, %v442
    %v452 = vld [vmem:[%s5] sm:$0xf]
    %v453 = vld [vmem:[%s5 + $0x4] sm:$0xf]
    %v454 = vld [vmem:[%s5 + $0x8] sm:$0xf]
    %v455 = vld [vmem:[%s5 + $0xc] sm:$0xf]
    %v456 = vld [vmem:[%s6] sm:$0x1]
    %v458 = vlaneseq
    %v459 = vshrl.u32 %v458, 7
    %v460 = vsub.s32 0, %v459
    %v461 = vrot.slane %v456, %v460
    %v467 = vunpack.c.l.b16 %v452
    %v468 = vunpack.c.l.b16 %v453
    %v469 = vunpack.c.l.b16 %v454
    %v470 = vunpack.c.l.b16 %v455
    %v471 = vpack.c.b16 %v468, %v467
    %v472 = vpack.c.b16 %v470, %v469
    %vm475 = vcmask 261120
    %v477 = vsel %vm475, %v444, 0
    %v480 = vsel %vm475, %v445, 0
    %v483 = vsel %vm475, %v446, 0
    %v486 = vsel %vm475, %v447, 0
    %v489 = vsel %vm475, %v448, 0
    %v492 = vsel %vm475, %v449, 0
    %v495 = vsel %vm475, %v450, 0
    %v498 = vsel %vm475, %v451, 0
    %500 = vmatprep.subr.bf16.mxu0 0
    %501 = vmatpush1.bf16.msra.mxu0 0
    %502 = vmatprep.subr.bf16.mxu0 0
    %503 = vmatpush1.bf16.msra.mxu0 0
    %504 = vmatprep.subr.bf16.mxu0 0
    %505 = vmatpush1.bf16.msra.mxu0 0
    %506 = vmatprep.subr.bf16.mxu0 0
    %507 = vmatpush1.bf16.msra.mxu0 0
    %508 = vmatprep.subr.bf16.mxu0 0
    %509 = vmatpush1.bf16.msra.mxu0 0
    %510 = vmatprep.subr.bf16.mxu0 0
    %511 = vmatpush1.bf16.msra.mxu0 0
    %512 = vmatprep.subr.bf16.mxu0 0
    %513 = vmatpush1.bf16.msra.mxu0 %v472
    %514 = vmatprep.subr.bf16.mxu0 0
    %515 = vmatpush1.bf16.msra.mxu0 %v471
    %516 = vmatprep.subr.bf16.mxu0 0
    %517 = vmatpush2.bf16.msra.mxu0 0
    %518 = vmatprep.subr.bf16.mxu0 0
    %519 = vmatpush2.bf16.msra.mxu0 0
    %520 = vmatprep.subr.bf16.mxu0 0
    %521 = vmatpush2.bf16.msra.mxu0 0
    %522 = vmatprep.subr.bf16.mxu0 0
    %523 = vmatpush2.bf16.msra.mxu0 0
    %524 = vmatprep.subr.bf16.mxu0 0
    %525 = vmatpush2.bf16.msra.mxu0 0
    %526 = vmatprep.subr.bf16.mxu0 0
    %527 = vmatpush2.bf16.msra.mxu0 0
    %528 = vmatprep.subr.bf16.mxu0 0
    %529 = vmatpush2.bf16.msra.mxu0 0
    %530 = vmatprep.subr.bf16.mxu0 0
    %531 = vmatpush2.bf16.msra.mxu0 0
    %532 = vmatprep.mubr.bf16.mxu0 0
    %533 = vmatmul.mubr.bf16.gmra.mxu0 %v477
    %v534 = vpop.f32.mrf.mxu0
    %v535 = vadd.f32 %v461, %v534
    %v536 = vpop.f32.mrf.mxu0
    %v537 = vpop.f32.mrf.mxu0
    %v538 = vadd.f32 %v461, %v537
    %v539 = vpop.f32.mrf.mxu0
    %540 = vmatprep.mubr.bf16.mxu0 0
    %541 = vmatmul.mubr.bf16.gmra.mxu0 %v480
    %v542 = vpop.f32.mrf.mxu0
    %v543 = vadd.f32 %v461, %v542
    %v544 = vpop.f32.mrf.mxu0
    %v545 = vpop.f32.mrf.mxu0
    %v546 = vadd.f32 %v461, %v545
    %v547 = vpop.f32.mrf.mxu0
    %548 = vmatprep.mubr.bf16.mxu0 0
    %549 = vmatmul.mubr.bf16.gmra.mxu0 %v483
    %v550 = vpop.f32.mrf.mxu0
    %v551 = vadd.f32 %v461, %v550
    %v552 = vpop.f32.mrf.mxu0
    %v553 = vpop.f32.mrf.mxu0
    %v554 = vadd.f32 %v461, %v553
    %v555 = vpop.f32.mrf.mxu0
    %556 = vmatprep.mubr.bf16.mxu0 0
    %557 = vmatmul.mubr.bf16.gmra.mxu0 %v486
    %v558 = vpop.f32.mrf.mxu0
    %v559 = vadd.f32 %v461, %v558
    %v560 = vpop.f32.mrf.mxu0
    %v561 = vpop.f32.mrf.mxu0
    %v562 = vadd.f32 %v461, %v561
    %v563 = vpop.f32.mrf.mxu0
    %564 = vmatprep.mubr.bf16.mxu0 0
    %565 = vmatmul.mubr.bf16.gmra.mxu0 %v489
    %v566 = vpop.f32.mrf.mxu0
    %v567 = vadd.f32 %v461, %v566
    %v568 = vpop.f32.mrf.mxu0
    %v569 = vpop.f32.mrf.mxu0
    %v570 = vadd.f32 %v461, %v569
    %v571 = vpop.f32.mrf.mxu0
    %572 = vmatprep.mubr.bf16.mxu0 0
    %573 = vmatmul.mubr.bf16.gmra.mxu0 %v492
    %v574 = vpop.f32.mrf.mxu0
    %v575 = vadd.f32 %v461, %v574
    %v576 = vpop.f32.mrf.mxu0
    %v577 = vpop.f32.mrf.mxu0
    %v578 = vadd.f32 %v461, %v577
    %v579 = vpop.f32.mrf.mxu0
    %580 = vmatprep.mubr.bf16.mxu0 0
    %581 = vmatmul.mubr.bf16.gmra.mxu0 %v495
    %v582 = vpop.f32.mrf.mxu0
    %v583 = vadd.f32 %v461, %v582
    %v584 = vpop.f32.mrf.mxu0
    %v585 = vpop.f32.mrf.mxu0
    %v586 = vadd.f32 %v461, %v585
    %v587 = vpop.f32.mrf.mxu0
    %588 = vmatprep.mubr.bf16.mxu0 0
    %589 = vmatmul.mubr.bf16.gmra.mxu0 %v498
    %v590 = vpop.f32.mrf.mxu0
    %v591 = vadd.f32 %v461, %v590
    %v592 = vpop.f32.mrf.mxu0
    %v593 = vpop.f32.mrf.mxu0
    %v594 = vadd.f32 %v461, %v593
    %v595 = vpop.f32.mrf.mxu0
    %596 = vdwg.mxu0
    %v597 = vmax.f32 %v535, 0.0
    %v598 = vmax.f32 %v538, 0.0
    %v599 = vmax.f32 %v543, 0.0
    %v600 = vmax.f32 %v546, 0.0
    %v601 = vmax.f32 %v551, 0.0
    %v602 = vmax.f32 %v554, 0.0
    %v603 = vmax.f32 %v559, 0.0
    %v604 = vmax.f32 %v562, 0.0
    %v605 = vmax.f32 %v567, 0.0
    %v606 = vmax.f32 %v570, 0.0
    %v607 = vmax.f32 %v575, 0.0
    %v608 = vmax.f32 %v578, 0.0
    %v609 = vmax.f32 %v583, 0.0
    %v610 = vmax.f32 %v586, 0.0
    %v611 = vmax.f32 %v591, 0.0
    %v612 = vmax.f32 %v594, 0.0
    %v613 = vld [vmem:[%s7] sm:$0x1]
    %v614 = vpack.c.bf16 %v598, %v597
    %v615 = vpack.c.bf16 %v600, %v599
    %v616 = vpack.c.bf16 %v602, %v601
    %v617 = vpack.c.bf16 %v604, %v603
    %v618 = vpack.c.bf16 %v606, %v605
    %v619 = vpack.c.bf16 %v608, %v607
    %v620 = vpack.c.bf16 %v610, %v609
    %v621 = vpack.c.bf16 %v612, %v611
    %v622 = vld [vmem:[#allocation2] sm:$0x1]
    %624 = vset.pattern.permute.xlu0 0
    %625 = vperm.xlu0 %624, %v622
    %v626 = vpop.permute.xlu0 %625
    %v628 = vlaneseq
    %v629 = vshrl.u32 %v628, 7
    %v630 = vsub.s32 0, %v629
    %v631 = vrot.slane %v626, %v630
    %v633 = vsel %vm475, %v613, 0
    %v636 = vsel %vm475, %v614, 0
    %v639 = vsel %vm475, %v615, 0
    %v642 = vsel %vm475, %v616, 0
    %v645 = vsel %vm475, %v617, 0
    %v648 = vsel %vm475, %v618, 0
    %v651 = vsel %vm475, %v619, 0
    %v654 = vsel %vm475, %v620, 0
    %v657 = vsel %vm475, %v621, 0
    %659 = vmatprep.subr.bf16.mxu0 0
    %660 = vmatpush1.bf16.xpose.msra.mxu0 %v657
    %661 = vmatprep.subr.bf16.mxu0 0
    %662 = vmatpush1.bf16.xpose.msra.mxu0 %v654
    %663 = vmatprep.subr.bf16.mxu0 0
    %664 = vmatpush1.bf16.xpose.msra.mxu0 %v651
    %665 = vmatprep.subr.bf16.mxu0 0
    %666 = vmatpush1.bf16.xpose.msra.mxu0 %v648
    %667 = vmatprep.subr.bf16.mxu0 0
    %668 = vmatpush1.bf16.xpose.msra.mxu0 %v645
    %669 = vmatprep.subr.bf16.mxu0 0
    %670 = vmatpush1.bf16.xpose.msra.mxu0 %v642
    %671 = vmatprep.subr.bf16.mxu0 0
    %672 = vmatpush1.bf16.xpose.msra.mxu0 %v639
    %673 = vmatprep.subr.bf16.mxu0 0
    %674 = vmatpush1.bf16.xpose.msra.mxu0 %v636
    %675 = vmatprep.subr.bf16.mxu0 0
    %676 = vmatpush2.bf16.xpose.msra.mxu0 0
    %677 = vmatprep.subr.bf16.mxu0 0
    %678 = vmatpush2.bf16.xpose.msra.mxu0 0
    %679 = vmatprep.subr.bf16.mxu0 0
    %680 = vmatpush2.bf16.xpose.msra.mxu0 0
    %681 = vmatprep.subr.bf16.mxu0 0
    %682 = vmatpush2.bf16.xpose.msra.mxu0 0
    %683 = vmatprep.subr.bf16.mxu0 0
    %684 = vmatpush2.bf16.xpose.msra.mxu0 0
    %685 = vmatprep.subr.bf16.mxu0 0
    %686 = vmatpush2.bf16.xpose.msra.mxu0 0
    %687 = vmatprep.subr.bf16.mxu0 0
    %688 = vmatpush2.bf16.xpose.msra.mxu0 0
    %689 = vmatprep.subr.bf16.mxu0 0
    %690 = vmatpush2.bf16.xpose.msra.mxu0 0
    %691 = vmatprep.mubr.bf16.mxu0 0
    %692 = vmatmul.mubr.bf16.gmra.mxu0 %v633
    %v693 = vpop.f32.mrf.mxu0
    %v694 = vadd.f32 %v631, %v693
    %v695 = vpop.f32.mrf.mxu0
    %v696 = vpop.f32.mrf.mxu0
    %v697 = vpop.f32.mrf.mxu0
    %698 = vdwg.mxu0
    %699 = vst [vmem:[#allocation3] sm:$0x1] %v694
    // Predicated region
    $region38: #{tpu_custom_call.1} parent=1 // pred_check
      _
    $region39: #{tpu_custom_call.1} parent=1 // pred_check_branch
      %701 = sbr.rel (0) target = $region41
    $region40: #{tpu_custom_call.1} parent=1 // pred_region
      %s703 = ssub.s32 16, 16
      %704 = vsyncadd [#allocation4], %s703
      %s706 = sshll.u32 [#allocation3], 4
      %s707 = int_to_ptr.vmem [resolvable:$true] %s706
      %709 = dma.vmem_to_hbm [thread:$0]  %s707, 16, %s9, [#allocation4]
    $region41: #{tpu_custom_call.1} parent=1 // pred_fallthru
      _
    // Predicated region
    $region42: #{tpu_custom_call.1} parent=1 // pred_check
      _
    $region43: #{tpu_custom_call.1} parent=1 // pred_check_branch
      %711 = sbr.rel (0) target = $region45
    $region44: #{tpu_custom_call.1} parent=1 // pred_region
      %712 = dma.done [#allocation4], 16
    $region45: #{tpu_custom_call.1} parent=1 // pred_fallthru
      _
    %713 = vsyncpa [#allocation4], 1

</llo_original>
